<compile_context>
chip_gen: v5e
topology: v5e:2x2
jax: 0.10.0
libtpu: 0.0.40
codegen_flags: <defaults>
</compile_context>

<pallas_src>
import jax
import jax.numpy as jnp
from jax.experimental import pallas as pl
from jax.experimental.pallas import tpu as pltpu


def _round_up(x, m):
    return ((x + m - 1) // m) * m


def _energy_kernel(x_ref, lvl_ref, w1_ref, wl_ref, b1_ref, w2_ref, b2_ref, o_ref):
    # x_ref  : [TB, D]  f32   flattened NCHW image tile (features on lanes)
    # lvl_ref: [TB, 1]  f32   conditioning level per sample
    # w1_ref : [D, Hd]  bf16  first-layer weight (VMEM-resident: constant index_map)
    # wl_ref : [1, Hd]  f32   level-conditioning weight row
    # b1_ref : [1, Hd]  f32   first-layer bias row
    # w2_ref : [1, Hd]  f32   output weight, lane-dense row (not [Hd, 1])
    # b2_ref : [1, 1]   f32   output bias
    # o_ref  : [TB, 1]  f32   raw energy per sample
    #
    # In-kernel bf16 cast: single f32 HBM read of x, cast is VPU work hidden
    # under the streaming DMA (avoids separate XLA cast+pad passes over x).
    x_bf = x_ref[...].astype(jnp.bfloat16)
    h = jnp.dot(x_bf, w1_ref[...], preferred_element_type=jnp.float32)
    # K=1 "matmul" as a VPU broadcast multiply (keeps the MXU free / no underfill).
    h = h + lvl_ref[...] * wl_ref[...] + b1_ref[...]
    h = jnp.maximum(h, 0.0)
    # N=1 output "matmul" as VPU multiply + lane reduce (XLU).  Output is tiny
    # (~1/D of input bytes), so the [TB,1] store is negligible vs. the x DMA.
    e = jnp.sum(h * w2_ref[...], axis=-1, keepdims=True) + b2_ref[...]
    o_ref[...] = e.astype(o_ref.dtype)


def conditional_energy(data_nchw, level, params, *, block_b=None):
    """ConditionalEnergy.forward(data, level) -> raw_energy, shape [B, 1]."""
    B = data_nchw.shape[0]
    w1, wl, b1, w2, b2 = params
    D, Hd = w1.shape

    # --- batch tile selection -------------------------------------------------
    N_BUF_TARGET = 3  # pipeline depth target for the streaming x operand
    if block_b is None:
        if B <= 128:
            # Tiny batches: one sublane-aligned tile; don't pad beyond 8 rows.
            block_b = _round_up(max(B, 1), 8)
        else:
            # Large batches: f32 x tiles, ~40 MiB total x-buffer budget so the
            # pipeline fits under v7x's 64 MiB VMEM while amortizing per-step
            # overhead on all generations (block_b typically 1024-2048).
            budget = 40 * 1024 * 1024
            block_b = 2048
            while block_b > 256 and N_BUF_TARGET * block_b * D * 4 > budget:
                block_b //= 2
    # v7x has 2 TensorCores: guarantee >= 2 "parallel" grid steps when possible
    # so the batch can be split across both cores.
    if B > 8 and pl.cdiv(B, block_b) < 2:
        block_b = max(8, _round_up(pl.cdiv(B, 2), 8))

    num_steps = pl.cdiv(B, block_b)
    n_buf = 3 if num_steps >= 3 else 2

    # --- operand plumbing (no cast / no pad of x in the wrapper) --------------
    x = data_nchw.reshape(B, -1)                               # [B, D], original dtype
    lvl = level.reshape(B, 1).astype(jnp.float32)              # [B, 1]

    w1_bf = w1.astype(jnp.bfloat16)                            # [D, Hd] bf16 for the MXU
    wl_row = wl.reshape(1, Hd).astype(jnp.float32)             # [1, Hd]
    b1_row = b1.reshape(1, Hd).astype(jnp.float32)             # [1, Hd]
    w2_row = w2.reshape(1, Hd).astype(jnp.float32)             # lane-dense [1, Hd]
    b2_sc = b2.reshape(1, 1).astype(jnp.float32)               # [1, 1]

    batch_map = lambda i: (i, 0)
    const_map = lambda i: (0, 0)
    # NOTE: weight specs keep the default double-buffer; with constant index_maps
    # they are DMA'd once anyway.  Switch to pl.Buffered(1) if D/Hd grow enough
    # to pressure VMEM on v7x.
    in_specs = [
        pl.BlockSpec((block_b, D), batch_map,
                     pipeline_mode=pl.Buffered(n_buf)),        # x streams over the batch
        pl.BlockSpec((block_b, 1), batch_map),                 # level tile
        pl.BlockSpec((D, Hd), const_map),                      # W1: VMEM-resident
        pl.BlockSpec((1, Hd), const_map),                      # Wl
        pl.BlockSpec((1, Hd), const_map),                      # b1
        pl.BlockSpec((1, Hd), const_map),                      # W2 (row form)
        pl.BlockSpec((1, 1), const_map),                       # b2
    ]

    out = pl.pallas_call(
        _energy_kernel,
        out_shape=jax.ShapeDtypeStruct((B, 1), jnp.float32),   # exact B; tail writes masked
        grid=(num_steps,),
        in_specs=in_specs,
        out_specs=pl.BlockSpec((block_b, 1), batch_map),
        compiler_params=pltpu.CompilerParams(
            dimension_semantics=("parallel",),                 # independent batch tiles
            vmem_limit_bytes=48 * 1024 * 1024),                # raise scoped VMEM (default 16/32 MiB)
    )(x, lvl, w1_bf, wl_row, b1_row, w2_row, b2_sc)
    return out


def init_params(key, D, Hd):
    k1, k2, k3 = jax.random.split(key, 3)
    w1 = jax.random.normal(k1, (D, Hd), jnp.float32) * (1.0 / jnp.sqrt(D))
    wl = jax.random.normal(k2, (1, Hd), jnp.float32)
    b1 = jnp.zeros((1, Hd), jnp.float32)
    w2 = jax.random.normal(k3, (Hd, 1), jnp.float32) * (1.0 / jnp.sqrt(Hd))
    b2 = jnp.zeros((1, 1), jnp.float32)
    return (w1, wl, b1, w2, b2)


def reference_energy(data_nchw, level, params):
    """Pure-JAX f32 reference of the same forward pass."""
    B = data_nchw.shape[0]
    x = data_nchw.reshape(B, -1).astype(jnp.float32)
    w1, wl, b1, w2, b2 = params
    h = x @ w1 + level.reshape(B, 1) * wl.reshape(1, -1) + b1.reshape(1, -1)
    h = jnp.maximum(h, 0.0)
    return h @ w2.reshape(-1, 1) + b2.reshape(1, 1)


if __name__ == "__main__":
    # Small CIFAR-like shapes: batch=2, channels=4, spatial=16x16, hidden=128.
    B, C, H, W = 2, 4, 16, 16
    Hd = 128
    D = C * H * W

    key = jax.random.PRNGKey(0)
    kx, kl, kp = jax.random.split(key, 3)
    data = jax.random.normal(kx, (B, C, H, W), jnp.float32)     # NCHW, like PyTorch
    level = jax.random.uniform(kl, (B,), jnp.float32)           # conditioning level per sample
    params = init_params(kp, D, Hd)

    raw_energy = conditional_energy(data, level, params)
    jax.block_until_ready(raw_energy)
    assert raw_energy.shape == (B, 1)

    ref = reference_energy(data, level, params)
    scale = jnp.maximum(jnp.max(jnp.abs(ref)), 1.0)
    max_err = jnp.max(jnp.abs(raw_energy - ref))
    assert float(max_err) <= 5e-2 * float(scale), (float(max_err), float(scale))

    print("KERNEL_OK")
</pallas_src>

<mosaic_0001>
module attributes {stable_mosaic.version = 11 : i64} {
  func.func @_energy_kernel(%arg0: i32, %arg1: memref<8x1024xf32, #tpu.memory_space<vmem>>, %arg2: memref<8x1xf32, #tpu.memory_space<vmem>>, %arg3: memref<1024x128xbf16, #tpu.memory_space<vmem>>, %arg4: memref<1x128xf32, #tpu.memory_space<vmem>>, %arg5: memref<1x128xf32, #tpu.memory_space<vmem>>, %arg6: memref<1x128xf32, #tpu.memory_space<vmem>>, %arg7: memref<1x1xf32, #tpu.memory_space<vmem>>, %arg8: memref<8x1xf32, #tpu.memory_space<vmem>>) attributes {dimension_semantics = [#tpu.dimension_semantics<parallel>], iteration_bounds = array<i64: 1>, scalar_prefetch = 0 : i64, scratch_operands = 0 : i64, tpu.core_type = #tpu.core_type<tc>, window_params = [{pipeline_mode = #tpu.pipeline_mode<double_buffered>, transform_indices = @transform_0, window_bounds = array<i64: 8, 1024>}, {transform_indices = @transform_1, window_bounds = array<i64: 8, 1>}, {pipeline_mode = #tpu.pipeline_mode<synchronous>, transform_indices = @transform_2, window_bounds = array<i64: 1024, 128>}, {pipeline_mode = #tpu.pipeline_mode<synchronous>, transform_indices = @transform_3, window_bounds = array<i64: 1, 128>}, {pipeline_mode = #tpu.pipeline_mode<synchronous>, transform_indices = @transform_4, window_bounds = array<i64: 1, 128>}, {pipeline_mode = #tpu.pipeline_mode<synchronous>, transform_indices = @transform_5, window_bounds = array<i64: 1, 128>}, {pipeline_mode = #tpu.pipeline_mode<synchronous>, transform_indices = @transform_6, window_bounds = array<i64: 1, 1>}, {transform_indices = @transform_7, window_bounds = array<i64: 8, 1>}]} {
    %c0 = arith.constant 0 : index
    %c0_0 = arith.constant 0 : index
    %0 = vector.load %arg1[%c0, %c0_0] : memref<8x1024xf32, #tpu.memory_space<vmem>>, vector<8x1024xf32>
    %1 = arith.truncf %0 : vector<8x1024xf32> to vector<8x1024xbf16>
    %c0_1 = arith.constant 0 : index
    %c0_2 = arith.constant 0 : index
    %2 = vector.load %arg3[%c0_1, %c0_2] : memref<1024x128xbf16, #tpu.memory_space<vmem>>, vector<1024x128xbf16>
    %cst = arith.constant dense<0.000000e+00> : vector<8x128xf32>
    %3 = tpu.matmul %1, %2, %cst {dimension_numbers = #tpu.dot_dimension_numbers<[1], [0], [0], [1], [0, 0, 1, 1], [], []>} : vector<8x1024xbf16>, vector<1024x128xbf16>, vector<8x128xf32> -> vector<8x128xf32>
    %c0_3 = arith.constant 0 : index
    %c0_4 = arith.constant 0 : index
    %4 = vector.load %arg2[%c0_3, %c0_4] : memref<8x1xf32, #tpu.memory_space<vmem>>, vector<8x1xf32>
    %c0_5 = arith.constant 0 : index
    %c0_6 = arith.constant 0 : index
    %5 = vector.load %arg4[%c0_5, %c0_6] : memref<1x128xf32, #tpu.memory_space<vmem>>, vector<1x128xf32>
    %6 = vector.broadcast %4 : vector<8x1xf32> to vector<8x128xf32>
    %7 = vector.broadcast %5 : vector<1x128xf32> to vector<8x128xf32>
    %8 = arith.mulf %6, %7 : vector<8x128xf32>
    %9 = arith.addf %3, %8 : vector<8x128xf32>
    %c0_7 = arith.constant 0 : index
    %c0_8 = arith.constant 0 : index
    %10 = vector.load %arg5[%c0_7, %c0_8] : memref<1x128xf32, #tpu.memory_space<vmem>>, vector<1x128xf32>
    %11 = vector.broadcast %10 : vector<1x128xf32> to vector<8x128xf32>
    %12 = arith.addf %9, %11 : vector<8x128xf32>
    %cst_9 = arith.constant 0.000000e+00 : f32
    %13 = vector.broadcast %cst_9 : f32 to vector<8x128xf32>
    %14 = arith.maximumf %12, %13 : vector<8x128xf32>
    %c0_10 = arith.constant 0 : index
    %c0_11 = arith.constant 0 : index
    %15 = vector.load %arg6[%c0_10, %c0_11] : memref<1x128xf32, #tpu.memory_space<vmem>>, vector<1x128xf32>
    %16 = vector.broadcast %15 : vector<1x128xf32> to vector<8x128xf32>
    %17 = arith.mulf %14, %16 : vector<8x128xf32>
    %cst_12 = arith.constant dense<0.000000e+00> : vector<8xf32>
    %18 = vector.multi_reduction <add>, %17, %cst_12 [1] : vector<8x128xf32> to vector<8xf32>
    %19 = vector.shape_cast %18 : vector<8xf32> to vector<8x1xf32>
    %c0_13 = arith.constant 0 : index
    %c0_14 = arith.constant 0 : index
    %20 = vector.load %arg7[%c0_13, %c0_14] : memref<1x1xf32, #tpu.memory_space<vmem>>, vector<1x1xf32>
    %21 = vector.broadcast %20 : vector<1x1xf32> to vector<8x1xf32>
    %22 = arith.addf %19, %21 : vector<8x1xf32>
    %c0_15 = arith.constant 0 : index
    %c0_16 = arith.constant 0 : index
    %23 = vector.load %arg8[%c0_15, %c0_16] : memref<8x1xf32, #tpu.memory_space<vmem>>, vector<8x1xf32>
    tpu.vector_store %arg8[%c0_15, %c0_16], %22 {strides = array<i32>} : memref<8x1xf32, #tpu.memory_space<vmem>>, vector<8x1xf32>,
    return
  }
  func.func @transform_0(%arg0: i32) -> (i32, i32) {
    %c0_i32 = arith.constant 0 : i32
    %c0_i32_0 = arith.constant 0 : i32
    return %arg0, %c0_i32 : i32, i32
  }
  func.func @transform_1(%arg0: i32) -> (i32, i32) {
    %c0_i32 = arith.constant 0 : i32
    %c0_i32_0 = arith.constant 0 : i32
    return %arg0, %c0_i32 : i32, i32
  }
  func.func @transform_2(%arg0: i32) -> (i32, i32) {
    %c0_i32 = arith.constant 0 : i32
    %c0_i32_0 = arith.constant 0 : i32
    %c0_i32_1 = arith.constant 0 : i32
    return %c0_i32, %c0_i32_0 : i32, i32
  }
  func.func @transform_3(%arg0: i32) -> (i32, i32) {
    %c0_i32 = arith.constant 0 : i32
    %c0_i32_0 = arith.constant 0 : i32
    %c0_i32_1 = arith.constant 0 : i32
    return %c0_i32, %c0_i32_0 : i32, i32
  }
  func.func @transform_4(%arg0: i32) -> (i32, i32) {
    %c0_i32 = arith.constant 0 : i32
    %c0_i32_0 = arith.constant 0 : i32
    %c0_i32_1 = arith.constant 0 : i32
    return %c0_i32, %c0_i32_0 : i32, i32
  }
  func.func @transform_5(%arg0: i32) -> (i32, i32) {
    %c0_i32 = arith.constant 0 : i32
    %c0_i32_0 = arith.constant 0 : i32
    %c0_i32_1 = arith.constant 0 : i32
    return %c0_i32, %c0_i32_0 : i32, i32
  }
  func.func @transform_6(%arg0: i32) -> (i32, i32) {
    %c0_i32 = arith.constant 0 : i32
    %c0_i32_0 = arith.constant 0 : i32
    %c0_i32_1 = arith.constant 0 : i32
    return %c0_i32, %c0_i32_0 : i32, i32
  }
  func.func @transform_7(%arg0: i32) -> (i32, i32) {
    %c0_i32 = arith.constant 0 : i32
    %c0_i32_0 = arith.constant 0 : i32
    return %arg0, %c0_i32 : i32, i32
  }
}

</mosaic_0001>

<llo_original>
// kernel: tpu_custom_call.1
$region0: #{tpu_custom_call.1}
  #allocation0 [shape = 'u32[]', space=smem, size = 0x4, offset = 0x4, fixed_abs, tag = 'smem constant byte address 0x4 - core index']
  #allocation1 [shape = 'u32[72,128]{1,0:T(1,128)}', space=vmem, size = 0x9000, scoped, tag = 'internal scratch']
  #allocation2 [shape = 'f32[1,1]{1,0:T(1,128)S(1)}', space=vmem, size = 0x200, scoped, tag = 'scoped memory for tpu_custom_call.1']
  %s0 = inlined_call_operand.hbm [shape: f32[2,1024], index: 0, kind: input, shape index: {}]
  %s1 = inlined_call_operand.vmem [shape: f32[2,1], index: 1, kind: input, shape index: {}]
  %s2 = inlined_call_operand.hbm [shape: bf16[1024,128], index: 2, kind: input, shape index: {}]
  %s3 = inlined_call_operand.vmem [shape: f32[1,128], index: 3, kind: input, shape index: {}]
  %s4 = inlined_call_operand.vmem [shape: f32[1,128], index: 4, kind: input, shape index: {}]
  %s5 = inlined_call_operand.vmem [shape: f32[1,128], index: 5, kind: input, shape index: {}]
  %s6 = inlined_call_operand.<no memory space> [shape: f32[1,1], index: 6, kind: input, shape index: {}]
  %s7 = inlined_call_operand.vmem [shape: f32[2,1], index: 7, kind: output, shape index: {}]
  %s8 = sld [smem:[#allocation0]]
  $region76: #{tpu_custom_call.1} parent=0
    _
  %s10 = ssub.s32 1, %s8
  %s11 = scalar_select 0, %s10, %s8
  %v12 = vstv %s6
  %13 = vst [vmem:[#allocation2] sm:$0x1] %v12
  $region1: #{tpu_custom_call.1} parent=0
    #allocation3 [shape = 'u8[32768]{0}', space=vmem, size = 0x8000, scoped, tag = 'input window, operand 0, single buffered']
    #allocation4 [shape = 's32[1]{0}', space=sflag, size = 0x4, scoped, tag = 'scoped memory for tpu_custom_call.1']
    #allocation5 [shape = 'u8[262144]{0}', space=vmem, size = 0x40000, scoped, tag = 'input window, operand 2, single buffered']
    #allocation6 [shape = 's32[1]{0}', space=sflag, size = 0x4, scoped, tag = 'scoped memory for tpu_custom_call.1']
    #allocation7 [shape = 'u8[4096]{0}', space=vmem, size = 0x1000, scoped, tag = 'output window, operand 0, single buffered']
    %14 = vsyncpa [#allocation4], 0
    %15 = vsyncpa [#allocation6], 0
    // Predicated region
    $region2: #{tpu_custom_call.1} parent=1 // pred_check
      _
    $region3: #{tpu_custom_call.1} parent=1 // pred_check_branch
      %17 = sbr.rel (0) target = $region5
    $region4: #{tpu_custom_call.1} parent=1 // pred_region
      %19 = vsyncadd [#allocation4], 768
      %s20 = sshll.u32 %s0, 4
      %s21 = int_to_ptr.hbm [resolvable:$true] %s20
      %s22 = sshll.u32 [#allocation3], 4
      %s23 = int_to_ptr.vmem [resolvable:$true] %s22
      %28 = dma.hbm_to_vmem [thread:$0]  %s21, 256, %s23, [#allocation4], 256, 256, 16
    $region5: #{tpu_custom_call.1} parent=1 // pred_fallthru
      _
    // Predicated region
    $region6: #{tpu_custom_call.1} parent=1 // pred_check
      _
    $region7: #{tpu_custom_call.1} parent=1 // pred_check_branch
      %30 = sbr.rel (0) target = $region9
    $region8: #{tpu_custom_call.1} parent=1 // pred_region
      _
    $region9: #{tpu_custom_call.1} parent=1 // pred_fallthru
      _
    // Predicated region
    $region10: #{tpu_custom_call.1} parent=1 // pred_check
      _
    $region11: #{tpu_custom_call.1} parent=1 // pred_check_branch
      %32 = sbr.rel (0) target = $region13
    $region12: #{tpu_custom_call.1} parent=1 // pred_region
      %34 = vsyncadd [#allocation6], 0
      %s35 = sshll.u32 %s2, 4
      %s36 = int_to_ptr.hbm [resolvable:$true] %s35
      %s37 = sshll.u32 [#allocation5], 4
      %s38 = int_to_ptr.vmem [resolvable:$true] %s37
      %43 = dma.hbm_to_vmem [thread:$0]  %s36, 8192, %s38, [#allocation6], 64, 64, 4
    $region13: #{tpu_custom_call.1} parent=1 // pred_fallthru
      _
    // Predicated region
    $region14: #{tpu_custom_call.1} parent=1 // pred_check
      _
    $region15: #{tpu_custom_call.1} parent=1 // pred_check_branch
      %45 = sbr.rel (0) target = $region17
    $region16: #{tpu_custom_call.1} parent=1 // pred_region
      _
    $region17: #{tpu_custom_call.1} parent=1 // pred_fallthru
      _
    // Predicated region
    $region18: #{tpu_custom_call.1} parent=1 // pred_check
      _
    $region19: #{tpu_custom_call.1} parent=1 // pred_check_branch
      %47 = sbr.rel (0) target = $region21
    $region20: #{tpu_custom_call.1} parent=1 // pred_region
      _
    $region21: #{tpu_custom_call.1} parent=1 // pred_fallthru
      _
    // Predicated region
    $region22: #{tpu_custom_call.1} parent=1 // pred_check
      _
    $region23: #{tpu_custom_call.1} parent=1 // pred_check_branch
      %49 = sbr.rel (0) target = $region25
    $region24: #{tpu_custom_call.1} parent=1 // pred_region
      _
    $region25: #{tpu_custom_call.1} parent=1 // pred_fallthru
      _
    // Predicated region
    $region26: #{tpu_custom_call.1} parent=1 // pred_check
      _
    $region27: #{tpu_custom_call.1} parent=1 // pred_check_branch
      %51 = sbr.rel (0) target = $region29
    $region28: #{tpu_custom_call.1} parent=1 // pred_region
      _
    $region29: #{tpu_custom_call.1} parent=1 // pred_fallthru
      _
    // Predicated region
    $region30: #{tpu_custom_call.1} parent=1 // pred_check
      _
    $region31: #{tpu_custom_call.1} parent=1 // pred_check_branch
      %53 = sbr.rel (0) target = $region33
    $region32: #{tpu_custom_call.1} parent=1 // pred_region
      %55 = dma.done [#allocation4], 1024
    $region33: #{tpu_custom_call.1} parent=1 // pred_fallthru
      _
    // Predicated region
    $region34: #{tpu_custom_call.1} parent=1 // pred_check
      _
    $region35: #{tpu_custom_call.1} parent=1 // pred_check_branch
      %57 = sbr.rel (0) target = $region37
    $region36: #{tpu_custom_call.1} parent=1 // pred_region
      %59 = dma.done [#allocation6], 8192
    $region37: #{tpu_custom_call.1} parent=1 // pred_fallthru
      _
    %v60 = vld [vmem:[#allocation3] sm:$0xff]
    %v61 = vld [vmem:[#allocation3 + $0x8] sm:$0xff]
    %v62 = vld [vmem:[#allocation3 + $0x10] sm:$0xff]
    %v63 = vld [vmem:[#allocation3 + $0x18] sm:$0xff]
    %v64 = vld [vmem:[#allocation3 + $0x20] sm:$0xff]
    %v65 = vld [vmem:[#allocation3 + $0x28] sm:$0xff]
    %v66 = vld [vmem:[#allocation3 + $0x30] sm:$0xff]
    %v67 = vld [vmem:[#allocation3 + $0x38] sm:$0xff]
    %76 = vst [vmem:[#allocation1] ss:$4 sm:$0xff] %v60
    %s77 = scalar_lea.vmem [#allocation1], 1
    %78 = vst [vmem:[%s77] ss:$4 sm:$0xff] %v62
    %s79 = scalar_lea.vmem [#allocation1], 2
    %80 = vst [vmem:[%s79] ss:$4 sm:$0xff] %v64
    %s81 = scalar_lea.vmem [#allocation1], 3
    %82 = vst [vmem:[%s81] ss:$4 sm:$0xff] %v66
    %s83 = scalar_lea.vmem [#allocation1], 32
    %84 = vst [vmem:[%s83] ss:$4 sm:$0xff] %v61
    %s85 = scalar_lea.vmem [#allocation1], 33
    %86 = vst [vmem:[%s85] ss:$4 sm:$0xff] %v63
    %s87 = scalar_lea.vmem [#allocation1], 34
    %88 = vst [vmem:[%s87] ss:$4 sm:$0xff] %v65
    %s89 = scalar_lea.vmem [#allocation1], 35
    %90 = vst [vmem:[%s89] ss:$4 sm:$0xff] %v67
    %v91 = vld.sshfl [vmem:[#allocation1] sm:$0xff pattern:$0x73625140]
    %v92 = vld.sshfl [vmem:[#allocation1 + $0x8] sm:$0xff pattern:$0x73625140]
    %v93 = vld.sshfl [vmem:[#allocation1 + $0x10] sm:$0xff pattern:$0x73625140]
    %v94 = vld.sshfl [vmem:[#allocation1 + $0x18] sm:$0xff pattern:$0x73625140]
    %v95 = vld.sshfl [vmem:[#allocation1 + $0x20] sm:$0xff pattern:$0x73625140]
    %v96 = vld.sshfl [vmem:[#allocation1 + $0x28] sm:$0xff pattern:$0x73625140]
    %v97 = vld.sshfl [vmem:[#allocation1 + $0x30] sm:$0xff pattern:$0x73625140]
    %v98 = vld.sshfl [vmem:[#allocation1 + $0x38] sm:$0xff pattern:$0x73625140]
    %v107 = vpack.c.bf16 %v91, %v91
    %v108 = vpack.c.bf16 %v92, %v92
    %v109 = vpack.c.bf16 %v93, %v93
    %v110 = vpack.c.bf16 %v94, %v94
    %v111 = vpack.c.bf16 %v95, %v95
    %v112 = vpack.c.bf16 %v96, %v96
    %v113 = vpack.c.bf16 %v97, %v97
    %v114 = vpack.c.bf16 %v98, %v98
    %v115 = vld [vmem:[#allocation5] sm:$0xf]
    %v116 = vld [vmem:[#allocation5 + $0x4] sm:$0xf]
    %v117 = vld [vmem:[#allocation5 + $0x8] sm:$0xf]
    %v118 = vld [vmem:[#allocation5 + $0xc] sm:$0xf]
    %v119 = vld [vmem:[#allocation5 + $0x10] sm:$0xf]
    %v120 = vld [vmem:[#allocation5 + $0x14] sm:$0xf]
    %v121 = vld [vmem:[#allocation5 + $0x18] sm:$0xf]
    %v122 = vld [vmem:[#allocation5 + $0x1c] sm:$0xf]
    %v123 = vld [vmem:[#allocation5 + $0x20] sm:$0xf]
    %v124 = vld [vmem:[#allocation5 + $0x24] sm:$0xf]
    %v125 = vld [vmem:[#allocation5 + $0x28] sm:$0xf]
    %v126 = vld [vmem:[#allocation5 + $0x2c] sm:$0xf]
    %v127 = vld [vmem:[#allocation5 + $0x30] sm:$0xf]
    %v128 = vld [vmem:[#allocation5 + $0x34] sm:$0xf]
    %v129 = vld [vmem:[#allocation5 + $0x38] sm:$0xf]
    %v130 = vld [vmem:[#allocation5 + $0x3c] sm:$0xf]
    %v131 = vld [vmem:[#allocation5 + $0x40] sm:$0xf]
    %v132 = vld [vmem:[#allocation5 + $0x44] sm:$0xf]
    %v133 = vld [vmem:[#allocation5 + $0x48] sm:$0xf]
    %v134 = vld [vmem:[#allocation5 + $0x4c] sm:$0xf]
    %v135 = vld [vmem:[#allocation5 + $0x50] sm:$0xf]
    %v136 = vld [vmem:[#allocation5 + $0x54] sm:$0xf]
    %v137 = vld [vmem:[#allocation5 + $0x58] sm:$0xf]
    %v138 = vld [vmem:[#allocation5 + $0x5c] sm:$0xf]
    %v139 = vld [vmem:[#allocation5 + $0x60] sm:$0xf]
    %v140 = vld [vmem:[#allocation5 + $0x64] sm:$0xf]
    %v141 = vld [vmem:[#allocation5 + $0x68] sm:$0xf]
    %v142 = vld [vmem:[#allocation5 + $0x6c] sm:$0xf]
    %v143 = vld [vmem:[#allocation5 + $0x70] sm:$0xf]
    %v144 = vld [vmem:[#allocation5 + $0x74] sm:$0xf]
    %v145 = vld [vmem:[#allocation5 + $0x78] sm:$0xf]
    %v146 = vld [vmem:[#allocation5 + $0x7c] sm:$0xf]
    %v147 = vld [vmem:[#allocation5 + $0x80] sm:$0xf]
    %v148 = vld [vmem:[#allocation5 + $0x84] sm:$0xf]
    %v149 = vld [vmem:[#allocation5 + $0x88] sm:$0xf]
    %v150 = vld [vmem:[#allocation5 + $0x8c] sm:$0xf]
    %v151 = vld [vmem:[#allocation5 + $0x90] sm:$0xf]
    %v152 = vld [vmem:[#allocation5 + $0x94] sm:$0xf]
    %v153 = vld [vmem:[#allocation5 + $0x98] sm:$0xf]
    %v154 = vld [vmem:[#allocation5 + $0x9c] sm:$0xf]
    %v155 = vld [vmem:[#allocation5 + $0xa0] sm:$0xf]
    %v156 = vld [vmem:[#allocation5 + $0xa4] sm:$0xf]
    %v157 = vld [vmem:[#allocation5 + $0xa8] sm:$0xf]
    %v158 = vld [vmem:[#allocation5 + $0xac] sm:$0xf]
    %v159 = vld [vmem:[#allocation5 + $0xb0] sm:$0xf]
    %v160 = vld [vmem:[#allocation5 + $0xb4] sm:$0xf]
    %v161 = vld [vmem:[#allocation5 + $0xb8] sm:$0xf]
    %v162 = vld [vmem:[#allocation5 + $0xbc] sm:$0xf]
    %v163 = vld [vmem:[#allocation5 + $0xc0] sm:$0xf]
    %v164 = vld [vmem:[#allocation5 + $0xc4] sm:$0xf]
    %v165 = vld [vmem:[#allocation5 + $0xc8] sm:$0xf]
    %v166 = vld [vmem:[#allocation5 + $0xcc] sm:$0xf]
    %v167 = vld [vmem:[#allocation5 + $0xd0] sm:$0xf]
    %v168 = vld [vmem:[#allocation5 + $0xd4] sm:$0xf]
    %v169 = vld [vmem:[#allocation5 + $0xd8] sm:$0xf]
    %v170 = vld [vmem:[#allocation5 + $0xdc] sm:$0xf]
    %v171 = vld [vmem:[#allocation5 + $0xe0] sm:$0xf]
    %v172 = vld [vmem:[#allocation5 + $0xe4] sm:$0xf]
    %v173 = vld [vmem:[#allocation5 + $0xe8] sm:$0xf]
    %v174 = vld [vmem:[#allocation5 + $0xec] sm:$0xf]
    %v175 = vld [vmem:[#allocation5 + $0xf0] sm:$0xf]
    %v176 = vld [vmem:[#allocation5 + $0xf4] sm:$0xf]
    %v177 = vld [vmem:[#allocation5 + $0xf8] sm:$0xf]
    %v178 = vld [vmem:[#allocation5 + $0xfc] sm:$0xf]
    %v179 = vld [vmem:[#allocation5 + $0x100] sm:$0xf]
    %v180 = vld [vmem:[#allocation5 + $0x104] sm:$0xf]
    %v181 = vld [vmem:[#allocation5 + $0x108] sm:$0xf]
    %v182 = vld [vmem:[#allocation5 + $0x10c] sm:$0xf]
    %v183 = vld [vmem:[#allocation5 + $0x110] sm:$0xf]
    %v184 = vld [vmem:[#allocation5 + $0x114] sm:$0xf]
    %v185 = vld [vmem:[#allocation5 + $0x118] sm:$0xf]
    %v186 = vld [vmem:[#allocation5 + $0x11c] sm:$0xf]
    %v187 = vld [vmem:[#allocation5 + $0x120] sm:$0xf]
    %v188 = vld [vmem:[#allocation5 + $0x124] sm:$0xf]
    %v189 = vld [vmem:[#allocation5 + $0x128] sm:$0xf]
    %v190 = vld [vmem:[#allocation5 + $0x12c] sm:$0xf]
    %v191 = vld [vmem:[#allocation5 + $0x130] sm:$0xf]
    %v192 = vld [vmem:[#allocation5 + $0x134] sm:$0xf]
    %v193 = vld [vmem:[#allocation5 + $0x138] sm:$0xf]
    %v194 = vld [vmem:[#allocation5 + $0x13c] sm:$0xf]
    %v195 = vld [vmem:[#allocation5 + $0x140] sm:$0xf]
    %v196 = vld [vmem:[#allocation5 + $0x144] sm:$0xf]
    %v197 = vld [vmem:[#allocation5 + $0x148] sm:$0xf]
    %v198 = vld [vmem:[#allocation5 + $0x14c] sm:$0xf]
    %v199 = vld [vmem:[#allocation5 + $0x150] sm:$0xf]
    %v200 = vld [vmem:[#allocation5 + $0x154] sm:$0xf]
    %v201 = vld [vmem:[#allocation5 + $0x158] sm:$0xf]
    %v202 = vld [vmem:[#allocation5 + $0x15c] sm:$0xf]
    %v203 = vld [vmem:[#allocation5 + $0x160] sm:$0xf]
    %v204 = vld [vmem:[#allocation5 + $0x164] sm:$0xf]
    %v205 = vld [vmem:[#allocation5 + $0x168] sm:$0xf]
    %v206 = vld [vmem:[#allocation5 + $0x16c] sm:$0xf]
    %v207 = vld [vmem:[#allocation5 + $0x170] sm:$0xf]
    %v208 = vld [vmem:[#allocation5 + $0x174] sm:$0xf]
    %v209 = vld [vmem:[#allocation5 + $0x178] sm:$0xf]
    %v210 = vld [vmem:[#allocation5 + $0x17c] sm:$0xf]
    %v211 = vld [vmem:[#allocation5 + $0x180] sm:$0xf]
    %v212 = vld [vmem:[#allocation5 + $0x184] sm:$0xf]
    %v213 = vld [vmem:[#allocation5 + $0x188] sm:$0xf]
    %v214 = vld [vmem:[#allocation5 + $0x18c] sm:$0xf]
    %v215 = vld [vmem:[#allocation5 + $0x190] sm:$0xf]
    %v216 = vld [vmem:[#allocation5 + $0x194] sm:$0xf]
    %v217 = vld [vmem:[#allocation5 + $0x198] sm:$0xf]
    %v218 = vld [vmem:[#allocation5 + $0x19c] sm:$0xf]
    %v219 = vld [vmem:[#allocation5 + $0x1a0] sm:$0xf]
    %v220 = vld [vmem:[#allocation5 + $0x1a4] sm:$0xf]
    %v221 = vld [vmem:[#allocation5 + $0x1a8] sm:$0xf]
    %v222 = vld [vmem:[#allocation5 + $0x1ac] sm:$0xf]
    %v223 = vld [vmem:[#allocation5 + $0x1b0] sm:$0xf]
    %v224 = vld [vmem:[#allocation5 + $0x1b4] sm:$0xf]
    %v225 = vld [vmem:[#allocation5 + $0x1b8] sm:$0xf]
    %v226 = vld [vmem:[#allocation5 + $0x1bc] sm:$0xf]
    %v227 = vld [vmem:[#allocation5 + $0x1c0] sm:$0xf]
    %v228 = vld [vmem:[#allocation5 + $0x1c4] sm:$0xf]
    %v229 = vld [vmem:[#allocation5 + $0x1c8] sm:$0xf]
    %v230 = vld [vmem:[#allocation5 + $0x1cc] sm:$0xf]
    %v231 = vld [vmem:[#allocation5 + $0x1d0] sm:$0xf]
    %v232 = vld [vmem:[#allocation5 + $0x1d4] sm:$0xf]
    %v233 = vld [vmem:[#allocation5 + $0x1d8] sm:$0xf]
    %v234 = vld [vmem:[#allocation5 + $0x1dc] sm:$0xf]
    %v235 = vld [vmem:[#allocation5 + $0x1e0] sm:$0xf]
    %v236 = vld [vmem:[#allocation5 + $0x1e4] sm:$0xf]
    %v237 = vld [vmem:[#allocation5 + $0x1e8] sm:$0xf]
    %v238 = vld [vmem:[#allocation5 + $0x1ec] sm:$0xf]
    %v239 = vld [vmem:[#allocation5 + $0x1f0] sm:$0xf]
    %v240 = vld [vmem:[#allocation5 + $0x1f4] sm:$0xf]
    %v241 = vld [vmem:[#allocation5 + $0x1f8] sm:$0xf]
    %v242 = vld [vmem:[#allocation5 + $0x1fc] sm:$0xf]
    %v243 = vld [vmem:[%s1] sm:$0xff]
    %v244 = vld [vmem:[%s3] sm:$0x1]
    %246 = vset.pattern.permute.xlu0 0
    %247 = vperm.xlu0 %246, %v243
    %v248 = vpop.permute.xlu0 %247
    %v251 = vperm.slane %v244, 0
    %v253 = vmul.f32 %v248, %v251
    %v382 = vunpack.c.l.b16 %v115
    %v383 = vunpack.c.l.b16 %v116
    %v384 = vunpack.c.l.b16 %v117
    %v385 = vunpack.c.l.b16 %v118
    %v386 = vunpack.c.l.b16 %v119
    %v387 = vunpack.c.l.b16 %v120
    %v388 = vunpack.c.l.b16 %v121
    %v389 = vunpack.c.l.b16 %v122
    %v390 = vunpack.c.l.b16 %v123
    %v391 = vunpack.c.l.b16 %v124
    %v392 = vunpack.c.l.b16 %v125
    %v393 = vunpack.c.l.b16 %v126
    %v394 = vunpack.c.l.b16 %v127
    %v395 = vunpack.c.l.b16 %v128
    %v396 = vunpack.c.l.b16 %v129
    %v397 = vunpack.c.l.b16 %v130
    %v398 = vunpack.c.l.b16 %v131
    %v399 = vunpack.c.l.b16 %v132
    %v400 = vunpack.c.l.b16 %v133
    %v401 = vunpack.c.l.b16 %v134
    %v402 = vunpack.c.l.b16 %v135
    %v403 = vunpack.c.l.b16 %v136
    %v404 = vunpack.c.l.b16 %v137
    %v405 = vunpack.c.l.b16 %v138
    %v406 = vunpack.c.l.b16 %v139
    %v407 = vunpack.c.l.b16 %v140
    %v408 = vunpack.c.l.b16 %v141
    %v409 = vunpack.c.l.b16 %v142
    %v410 = vunpack.c.l.b16 %v143
    %v411 = vunpack.c.l.b16 %v144
    %v412 = vunpack.c.l.b16 %v145
    %v413 = vunpack.c.l.b16 %v146
    %v414 = vunpack.c.l.b16 %v147
    %v415 = vunpack.c.l.b16 %v148
    %v416 = vunpack.c.l.b16 %v149
    %v417 = vunpack.c.l.b16 %v150
    %v418 = vunpack.c.l.b16 %v151
    %v419 = vunpack.c.l.b16 %v152
    %v420 = vunpack.c.l.b16 %v153
    %v421 = vunpack.c.l.b16 %v154
    %v422 = vunpack.c.l.b16 %v155
    %v423 = vunpack.c.l.b16 %v156
    %v424 = vunpack.c.l.b16 %v157
    %v425 = vunpack.c.l.b16 %v158
    %v426 = vunpack.c.l.b16 %v159
    %v427 = vunpack.c.l.b16 %v160
    %v428 = vunpack.c.l.b16 %v161
    %v429 = vunpack.c.l.b16 %v162
    %v430 = vunpack.c.l.b16 %v163
    %v431 = vunpack.c.l.b16 %v164
    %v432 = vunpack.c.l.b16 %v165
    %v433 = vunpack.c.l.b16 %v166
    %v434 = vunpack.c.l.b16 %v167
    %v435 = vunpack.c.l.b16 %v168
    %v436 = vunpack.c.l.b16 %v169
    %v437 = vunpack.c.l.b16 %v170
    %v438 = vunpack.c.l.b16 %v171
    %v439 = vunpack.c.l.b16 %v172
    %v440 = vunpack.c.l.b16 %v173
    %v441 = vunpack.c.l.b16 %v174
    %v442 = vunpack.c.l.b16 %v175
    %v443 = vunpack.c.l.b16 %v176
    %v444 = vunpack.c.l.b16 %v177
    %v445 = vunpack.c.l.b16 %v178
    %v446 = vunpack.c.l.b16 %v179
    %v447 = vunpack.c.l.b16 %v180
    %v448 = vunpack.c.l.b16 %v181
    %v449 = vunpack.c.l.b16 %v182
    %v450 = vunpack.c.l.b16 %v183
    %v451 = vunpack.c.l.b16 %v184
    %v452 = vunpack.c.l.b16 %v185
    %v453 = vunpack.c.l.b16 %v186
    %v454 = vunpack.c.l.b16 %v187
    %v455 = vunpack.c.l.b16 %v188
    %v456 = vunpack.c.l.b16 %v189
    %v457 = vunpack.c.l.b16 %v190
    %v458 = vunpack.c.l.b16 %v191
    %v459 = vunpack.c.l.b16 %v192
    %v460 = vunpack.c.l.b16 %v193
    %v461 = vunpack.c.l.b16 %v194
    %v462 = vunpack.c.l.b16 %v195
    %v463 = vunpack.c.l.b16 %v196
    %v464 = vunpack.c.l.b16 %v197
    %v465 = vunpack.c.l.b16 %v198
    %v466 = vunpack.c.l.b16 %v199
    %v467 = vunpack.c.l.b16 %v200
    %v468 = vunpack.c.l.b16 %v201
    %v469 = vunpack.c.l.b16 %v202
    %v470 = vunpack.c.l.b16 %v203
    %v471 = vunpack.c.l.b16 %v204
    %v472 = vunpack.c.l.b16 %v205
    %v473 = vunpack.c.l.b16 %v206
    %v474 = vunpack.c.l.b16 %v207
    %v475 = vunpack.c.l.b16 %v208
    %v476 = vunpack.c.l.b16 %v209
    %v477 = vunpack.c.l.b16 %v210
    %v478 = vunpack.c.l.b16 %v211
    %v479 = vunpack.c.l.b16 %v212
    %v480 = vunpack.c.l.b16 %v213
    %v481 = vunpack.c.l.b16 %v214
    %v482 = vunpack.c.l.b16 %v215
    %v483 = vunpack.c.l.b16 %v216
    %v484 = vunpack.c.l.b16 %v217
    %v485 = vunpack.c.l.b16 %v218
    %v486 = vunpack.c.l.b16 %v219
    %v487 = vunpack.c.l.b16 %v220
    %v488 = vunpack.c.l.b16 %v221
    %v489 = vunpack.c.l.b16 %v222
    %v490 = vunpack.c.l.b16 %v223
    %v491 = vunpack.c.l.b16 %v224
    %v492 = vunpack.c.l.b16 %v225
    %v493 = vunpack.c.l.b16 %v226
    %v494 = vunpack.c.l.b16 %v227
    %v495 = vunpack.c.l.b16 %v228
    %v496 = vunpack.c.l.b16 %v229
    %v497 = vunpack.c.l.b16 %v230
    %v498 = vunpack.c.l.b16 %v231
    %v499 = vunpack.c.l.b16 %v232
    %v500 = vunpack.c.l.b16 %v233
    %v501 = vunpack.c.l.b16 %v234
    %v502 = vunpack.c.l.b16 %v235
    %v503 = vunpack.c.l.b16 %v236
    %v504 = vunpack.c.l.b16 %v237
    %v505 = vunpack.c.l.b16 %v238
    %v506 = vunpack.c.l.b16 %v239
    %v507 = vunpack.c.l.b16 %v240
    %v508 = vunpack.c.l.b16 %v241
    %v509 = vunpack.c.l.b16 %v242
    %v510 = vpack.c.b16 %v383, %v382
    %v511 = vpack.c.b16 %v385, %v384
    %v512 = vpack.c.b16 %v387, %v386
    %v513 = vpack.c.b16 %v389, %v388
    %v514 = vpack.c.b16 %v391, %v390
    %v515 = vpack.c.b16 %v393, %v392
    %v516 = vpack.c.b16 %v395, %v394
    %v517 = vpack.c.b16 %v397, %v396
    %v518 = vpack.c.b16 %v399, %v398
    %v519 = vpack.c.b16 %v401, %v400
    %v520 = vpack.c.b16 %v403, %v402
    %v521 = vpack.c.b16 %v405, %v404
    %v522 = vpack.c.b16 %v407, %v406
    %v523 = vpack.c.b16 %v409, %v408
    %v524 = vpack.c.b16 %v411, %v410
    %v525 = vpack.c.b16 %v413, %v412
    %v526 = vpack.c.b16 %v415, %v414
    %v527 = vpack.c.b16 %v417, %v416
    %v528 = vpack.c.b16 %v419, %v418
    %v529 = vpack.c.b16 %v421, %v420
    %v530 = vpack.c.b16 %v423, %v422
    %v531 = vpack.c.b16 %v425, %v424
    %v532 = vpack.c.b16 %v427, %v426
    %v533 = vpack.c.b16 %v429, %v428
    %v534 = vpack.c.b16 %v431, %v430
    %v535 = vpack.c.b16 %v433, %v432
    %v536 = vpack.c.b16 %v435, %v434
    %v537 = vpack.c.b16 %v437, %v436
    %v538 = vpack.c.b16 %v439, %v438
    %v539 = vpack.c.b16 %v441, %v440
    %v540 = vpack.c.b16 %v443, %v442
    %v541 = vpack.c.b16 %v445, %v444
    %v542 = vpack.c.b16 %v447, %v446
    %v543 = vpack.c.b16 %v449, %v448
    %v544 = vpack.c.b16 %v451, %v450
    %v545 = vpack.c.b16 %v453, %v452
    %v546 = vpack.c.b16 %v455, %v454
    %v547 = vpack.c.b16 %v457, %v456
    %v548 = vpack.c.b16 %v459, %v458
    %v549 = vpack.c.b16 %v461, %v460
    %v550 = vpack.c.b16 %v463, %v462
    %v551 = vpack.c.b16 %v465, %v464
    %v552 = vpack.c.b16 %v467, %v466
    %v553 = vpack.c.b16 %v469, %v468
    %v554 = vpack.c.b16 %v471, %v470
    %v555 = vpack.c.b16 %v473, %v472
    %v556 = vpack.c.b16 %v475, %v474
    %v557 = vpack.c.b16 %v477, %v476
    %v558 = vpack.c.b16 %v479, %v478
    %v559 = vpack.c.b16 %v481, %v480
    %v560 = vpack.c.b16 %v483, %v482
    %v561 = vpack.c.b16 %v485, %v484
    %v562 = vpack.c.b16 %v487, %v486
    %v563 = vpack.c.b16 %v489, %v488
    %v564 = vpack.c.b16 %v491, %v490
    %v565 = vpack.c.b16 %v493, %v492
    %v566 = vpack.c.b16 %v495, %v494
    %v567 = vpack.c.b16 %v497, %v496
    %v568 = vpack.c.b16 %v499, %v498
    %v569 = vpack.c.b16 %v501, %v500
    %v570 = vpack.c.b16 %v503, %v502
    %v571 = vpack.c.b16 %v505, %v504
    %v572 = vpack.c.b16 %v507, %v506
    %v573 = vpack.c.b16 %v509, %v508
    %638 = vmatpush.bf16.msra.mxu0 %v517
    %639 = vmatpush.bf16.msra.mxu0 %v516
    %640 = vmatpush.bf16.msra.mxu0 %v515
    %641 = vmatpush.bf16.msra.mxu0 %v514
    %642 = vmatpush.bf16.msra.mxu0 %v513
    %643 = vmatpush.bf16.msra.mxu0 %v512
    %644 = vmatpush.bf16.msra.mxu0 %v511
    %645 = vmatpush.bf16.msra.mxu0 %v510
    %646 = vmatmul.bf16.gmra.mxu0 %v107
    %v647 = vpop.f32.mrf.mxu0
    %v648 = vadd.f32 %v253, %v647
    %v649 = vpop.f32.mrf.mxu0
    %650 = vdwg.mxu0
    %651 = vmatpush.bf16.msra.mxu0 %v525
    %652 = vmatpush.bf16.msra.mxu0 %v524
    %653 = vmatpush.bf16.msra.mxu0 %v523
    %654 = vmatpush.bf16.msra.mxu0 %v522
    %655 = vmatpush.bf16.msra.mxu0 %v521
    %656 = vmatpush.bf16.msra.mxu0 %v520
    %657 = vmatpush.bf16.msra.mxu0 %v519
    %658 = vmatpush.bf16.msra.mxu0 %v518
    %659 = vmatmul.bf16.gmra.mxu0 %v108
    %v660 = vpop.f32.mrf.mxu0
    %v661 = vadd.f32 %v648, %v660
    %v662 = vpop.f32.mrf.mxu0
    %663 = vdwg.mxu0
    %664 = vmatpush.bf16.msra.mxu0 %v533
    %665 = vmatpush.bf16.msra.mxu0 %v532
    %666 = vmatpush.bf16.msra.mxu0 %v531
    %667 = vmatpush.bf16.msra.mxu0 %v530
    %668 = vmatpush.bf16.msra.mxu0 %v529
    %669 = vmatpush.bf16.msra.mxu0 %v528
    %670 = vmatpush.bf16.msra.mxu0 %v527
    %671 = vmatpush.bf16.msra.mxu0 %v526
    %672 = vmatmul.bf16.gmra.mxu0 %v109
    %v673 = vpop.f32.mrf.mxu0
    %v674 = vadd.f32 %v661, %v673
    %v675 = vpop.f32.mrf.mxu0
    %676 = vdwg.mxu0
    %677 = vmatpush.bf16.msra.mxu0 %v541
    %678 = vmatpush.bf16.msra.mxu0 %v540
    %679 = vmatpush.bf16.msra.mxu0 %v539
    %680 = vmatpush.bf16.msra.mxu0 %v538
    %681 = vmatpush.bf16.msra.mxu0 %v537
    %682 = vmatpush.bf16.msra.mxu0 %v536
    %683 = vmatpush.bf16.msra.mxu0 %v535
    %684 = vmatpush.bf16.msra.mxu0 %v534
    %685 = vmatmul.bf16.gmra.mxu0 %v110
    %v686 = vpop.f32.mrf.mxu0
    %v687 = vadd.f32 %v674, %v686
    %v688 = vpop.f32.mrf.mxu0
    %689 = vdwg.mxu0
    %690 = vmatpush.bf16.msra.mxu0 %v549
    %691 = vmatpush.bf16.msra.mxu0 %v548
    %692 = vmatpush.bf16.msra.mxu0 %v547
    %693 = vmatpush.bf16.msra.mxu0 %v546
    %694 = vmatpush.bf16.msra.mxu0 %v545
    %695 = vmatpush.bf16.msra.mxu0 %v544
    %696 = vmatpush.bf16.msra.mxu0 %v543
    %697 = vmatpush.bf16.msra.mxu0 %v542
    %698 = vmatmul.bf16.gmra.mxu0 %v111
    %v699 = vpop.f32.mrf.mxu0
    %v700 = vadd.f32 %v687, %v699
    %v701 = vpop.f32.mrf.mxu0
    %702 = vdwg.mxu0
    %703 = vmatpush.bf16.msra.mxu0 %v557
    %704 = vmatpush.bf16.msra.mxu0 %v556
    %705 = vmatpush.bf16.msra.mxu0 %v555
    %706 = vmatpush.bf16.msra.mxu0 %v554
    %707 = vmatpush.bf16.msra.mxu0 %v553
    %708 = vmatpush.bf16.msra.mxu0 %v552
    %709 = vmatpush.bf16.msra.mxu0 %v551
    %710 = vmatpush.bf16.msra.mxu0 %v550
    %711 = vmatmul.bf16.gmra.mxu0 %v112
    %v712 = vpop.f32.mrf.mxu0
    %v713 = vadd.f32 %v700, %v712
    %v714 = vpop.f32.mrf.mxu0
    %715 = vdwg.mxu0
    %716 = vmatpush.bf16.msra.mxu0 %v565
    %717 = vmatpush.bf16.msra.mxu0 %v564
    %718 = vmatpush.bf16.msra.mxu0 %v563
    %719 = vmatpush.bf16.msra.mxu0 %v562
    %720 = vmatpush.bf16.msra.mxu0 %v561
    %721 = vmatpush.bf16.msra.mxu0 %v560
    %722 = vmatpush.bf16.msra.mxu0 %v559
    %723 = vmatpush.bf16.msra.mxu0 %v558
    %724 = vmatmul.bf16.gmra.mxu0 %v113
    %v725 = vpop.f32.mrf.mxu0
    %v726 = vadd.f32 %v713, %v725
    %v727 = vpop.f32.mrf.mxu0
    %728 = vdwg.mxu0
    %729 = vmatpush.bf16.msra.mxu0 %v573
    %730 = vmatpush.bf16.msra.mxu0 %v572
    %731 = vmatpush.bf16.msra.mxu0 %v571
    %732 = vmatpush.bf16.msra.mxu0 %v570
    %733 = vmatpush.bf16.msra.mxu0 %v569
    %734 = vmatpush.bf16.msra.mxu0 %v568
    %735 = vmatpush.bf16.msra.mxu0 %v567
    %736 = vmatpush.bf16.msra.mxu0 %v566
    %737 = vmatmul.bf16.gmra.mxu0 %v114
    %v738 = vpop.f32.mrf.mxu0
    %v739 = vadd.f32 %v726, %v738
    %v740 = vpop.f32.mrf.mxu0
    %741 = vdwg.mxu0
    %v742 = vld [vmem:[%s4] sm:$0x1]
    %v744 = vperm.slane %v742, 0
    %v746 = vadd.f32 %v739, %v744
    %v747 = vmax.f32 %v746, 0.0
    %v748 = vld [vmem:[%s5] sm:$0x1]
    %v750 = vperm.slane %v748, 0
    %v752 = vmul.f32 %v747, %v750
    %753 = vadd.xlane.f32.xlu0 %v752
    %v754 = vpop.xlane.xlu0 %753
    %v755 = vld [vmem:[#allocation2] sm:$0x1]
    %v757 = vperm.slane %v755, 0
    %v759 = vadd.f32 %v754, %v757
    %vm760 = vcmask 7168
    %761 = vst.msk [vmem:[#allocation7] sm:$0xff] %vm760, %v759
    // Predicated region
    $region38: #{tpu_custom_call.1} parent=1 // pred_check
      _
    $region39: #{tpu_custom_call.1} parent=1 // pred_check_branch
      %763 = sbr.rel (0) target = $region41
    $region40: #{tpu_custom_call.1} parent=1 // pred_region
      // Predicated region
      $region42: #{tpu_custom_call.1} parent=40 // pred_check
        _
      $region43: #{tpu_custom_call.1} parent=40 // pred_check_branch
        %765 = sbr.rel (0) target = $region45
      $region44: #{tpu_custom_call.1} parent=40 // pred_region
        // Predicated region
        $region46: #{tpu_custom_call.1} parent=44 // pred_check
          _
        $region47: #{tpu_custom_call.1} parent=44 // pred_check_branch
          %767 = sbr.rel target = $region49
        $region48: #{tpu_custom_call.1} parent=44 // pred_region
          // Predicated region
          $region61: #{tpu_custom_call.1} parent=48 // pred_check
            _
          $region62: #{tpu_custom_call.1} parent=48 // pred_check_branch
            %783 = sbr.rel (0) target = $region64
          $region63: #{tpu_custom_call.1} parent=48 // pred_region
            %s785 = ssub.s32 4, 1
            loop: start=0, step=1, limit=1
            $region65: #{tpu_custom_call.1} parent=63 // loop_pre_header
              _
            $region66: #{tpu_custom_call.1} parent=63 // loop_header
              %s787 = sphi 0, %s791
              %p788 = scmp.ge.s32.totalorder %s787, 1
              %s792 = sphi [#allocation7], [#allocation7]
              %s793 = sphi %s7, %s7
            $region67: #{tpu_custom_call.1} parent=63 // loop_header_branch
              %790 = sbr.rel (%p788) target = $region71
            $region68: #{tpu_custom_call.1} parent=63 // loop_body
              %v794 = vld [vmem:[%s792] sm:%s785]
              %795 = vst [vmem:[%s793] sm:%s785] %v794
            $region69: #{tpu_custom_call.1} parent=63 // loop_footer
              %s791 = sadd.s32 1, %s787
            $region70: #{tpu_custom_call.1} parent=63 // loop_footer_branch
              %786 = sbr.rel target = $region66
            $region71: #{tpu_custom_call.1} parent=63 // loop_exit
              _
          $region64: #{tpu_custom_call.1} parent=48 // pred_fallthru
            _
        $region49: #{tpu_custom_call.1} parent=44 // pred_fallthru
          _
        // Predicated region
        $region50: #{tpu_custom_call.1} parent=44 // pred_check
          _
        $region51: #{tpu_custom_call.1} parent=44 // pred_check_branch
          %769 = sbr.rel (0) target = $region53
        $region52: #{tpu_custom_call.1} parent=44 // pred_region
          %s771 = ssub.s32 4, 1
          loop: start=0, step=1, limit=1
          $region54: #{tpu_custom_call.1} parent=52 // loop_pre_header
            _
          $region55: #{tpu_custom_call.1} parent=52 // loop_header
            %s773 = sphi 0, %s777
            %p774 = scmp.ge.s32.totalorder %s773, 1
            %s778 = sphi [#allocation7], [#allocation7]
            %s779 = sphi %s7, %s7
          $region56: #{tpu_custom_call.1} parent=52 // loop_header_branch
            %776 = sbr.rel (%p774) target = $region60
          $region57: #{tpu_custom_call.1} parent=52 // loop_body
            %v780 = vld [vmem:[%s778] sm:%s771]
            %781 = vst [vmem:[%s779] sm:%s771] %v780
          $region58: #{tpu_custom_call.1} parent=52 // loop_footer
            %s777 = sadd.s32 1, %s773
          $region59: #{tpu_custom_call.1} parent=52 // loop_footer_branch
            %772 = sbr.rel target = $region55
          $region60: #{tpu_custom_call.1} parent=52 // loop_exit
            _
        $region53: #{tpu_custom_call.1} parent=44 // pred_fallthru
          _
      $region45: #{tpu_custom_call.1} parent=40 // pred_fallthru
        _
      %796 = vnop
    $region41: #{tpu_custom_call.1} parent=1 // pred_fallthru
      _
    // Predicated region
    $region72: #{tpu_custom_call.1} parent=1 // pred_check
      _
    $region73: #{tpu_custom_call.1} parent=1 // pred_check_branch
      %798 = sbr.rel (0) target = $region75
    $region74: #{tpu_custom_call.1} parent=1 // pred_region
      _
    $region75: #{tpu_custom_call.1} parent=1 // pred_fallthru
      _
    %799 = vsyncpa [#allocation4], 1
    %800 = vsyncpa [#allocation6], 1

</llo_original>
